<compile_context>
chip_gen: v5e
topology: v5e:2x2
jax: 0.10.0
libtpu: 0.0.40
codegen_flags: <defaults>
</compile_context>

<pallas_src>
import functools

import jax
import jax.numpy as jnp
from jax.experimental import pallas as pl
from jax.experimental.pallas import tpu as pltpu


def _triplet_loss_kernel(a_ref, p_ref, n_ref, o_ref, ddiff_ref, cos_ref,
                         *, margin, alpha, batch, tile):
    i = pl.program_id(0)
    last = pl.num_programs(0) - 1

    a = a_ref[...].astype(jnp.float32)   # (TB, D)
    p = p_ref[...].astype(jnp.float32)
    n = n_ref[...].astype(jnp.float32)

    # Reused difference vectors (also define the distances).
    x1 = n - a                                              # negative - anchor
    x2 = p - a                                              # positive - anchor

    dn = jnp.sum(x1 * x1, axis=1, keepdims=True)            # ||a-n||^2  (B,1)
    dp = jnp.sum(x2 * x2, axis=1, keepdims=True)            # ||a-p||^2  (B,1)
    dot = jnp.sum(x1 * x2, axis=1, keepdims=True)           # (B,1)

    # cos = dot / max(||x1||*||x2||, eps)  -> one exact rsqrt on the squared norms.
    eps = jnp.float32(1e-6)
    cos = dot * jax.lax.rsqrt(jnp.maximum(dn * dp, eps * eps))

    # Mask rows of a ragged final tile (global row index >= batch).
    row = i * tile + jax.lax.broadcasted_iota(jnp.int32, (tile, 1), 0)
    valid = row < batch

    start = pl.multiple_of(i * tile, tile)
    ddiff_ref[pl.ds(start, tile), :] = jnp.where(valid, dp - dn, 0.0)
    cos_ref[pl.ds(start, tile), :] = jnp.where(valid, cos, 0.0)

    @pl.when(i == last)
    def _():
        cos_reg = jnp.sum(cos_ref[...])                     # scalar (batch-global)
        hinge = jnp.maximum(
            ddiff_ref[...] + jnp.float32(margin) - jnp.float32(alpha) * cos_reg,
            0.0,
        )                                                   # (B_pad, 1)
        rows = jax.lax.broadcasted_iota(jnp.int32, ddiff_ref.shape, 0)
        hinge = jnp.where(rows < batch, hinge, 0.0)
        o_ref[0, 0] = jnp.sum(hinge) / jnp.float32(batch)


def triplet_loss(anchor, positive, negative, *, margin=1.0, alpha=0.1,
                 block_rows=None):
    """Pallas TPU implementation of TripletLoss.forward (size_average=True)."""
    assert anchor.shape == positive.shape == negative.shape
    assert anchor.ndim == 2, "expected (B, D) embeddings"
    B, D = anchor.shape

    if block_rows is None:
        # Budget the double-buffered input working set (3 arrays x 2 buffers) to
        # ~12 MiB so it fits every generation's default/physical scoped VMEM.
        itemsize = jnp.dtype(anchor.dtype).itemsize
        budget = 12 * 1024 * 1024
        tb = budget // (6 * D * itemsize)
        tb = int(max(8, min(tb, 2048)))
        tb = (tb // 8) * 8
        block_rows = B if tb >= B else tb
    tb = int(block_rows)
    if tb < B:
        assert tb % 8 == 0, "block_rows must be a multiple of 8 when tiling"
    num_tiles = (B + tb - 1) // tb
    b_pad = num_tiles * tb

    kernel = functools.partial(
        _triplet_loss_kernel,
        margin=float(margin), alpha=float(alpha), batch=B, tile=tb,
    )
    out = pl.pallas_call(
        kernel,
        out_shape=jax.ShapeDtypeStruct((1, 1), jnp.float32),
        grid_spec=pltpu.PrefetchScalarGridSpec(
            num_scalar_prefetch=0,
            grid=(num_tiles,),
            in_specs=[
                pl.BlockSpec((tb, D), lambda i: (i, 0)),
                pl.BlockSpec((tb, D), lambda i: (i, 0)),
                pl.BlockSpec((tb, D), lambda i: (i, 0)),
            ],
            out_specs=pl.BlockSpec(memory_space=pltpu.SMEM),
            scratch_shapes=[
                pltpu.VMEM((b_pad, 1), jnp.float32),   # per-row dp - dn
                pltpu.VMEM((b_pad, 1), jnp.float32),   # per-row cosine similarity
            ],
        ),
        compiler_params=pltpu.CompilerParams(
            dimension_semantics=("arbitrary",),
            vmem_limit_bytes=32 * 1024 * 1024,
        ),
    )(anchor, positive, negative)
    return out[0, 0]


def triplet_loss_ref(anchor, positive, negative, *, margin=1.0, alpha=0.1):
    """Pure-JAX reference mirroring the PyTorch module."""
    dp = jnp.sum((anchor - positive) ** 2, axis=1)
    dn = jnp.sum((anchor - negative) ** 2, axis=1)
    x1 = negative - anchor
    x2 = positive - anchor
    eps = 1e-6
    # torch.nn.CosineSimilarity clamps the product of the norms at eps.
    cos = jnp.sum(x1 * x2, axis=1) / jnp.maximum(
        jnp.linalg.norm(x1, axis=1) * jnp.linalg.norm(x2, axis=1), eps)
    cos_reg = jnp.sum(cos)
    losses = jax.nn.relu(dp - dn + margin - alpha * cos_reg)
    return jnp.mean(losses)


if __name__ == "__main__":
    key = jax.random.PRNGKey(0)

    # Case 1: small single-tile batch.
    k_a, k_p, k_n = jax.random.split(key, 3)
    B, D = 8, 32
    anchor = jax.random.normal(k_a, (B, D), dtype=jnp.float32)
    positive = jax.random.normal(k_p, (B, D), dtype=jnp.float32)
    negative = jax.random.normal(k_n, (B, D), dtype=jnp.float32)

    loss = triplet_loss(anchor, positive, negative, margin=1.0, alpha=0.1)
    jax.block_until_ready(loss)
    ref = triplet_loss_ref(anchor, positive, negative, margin=1.0, alpha=0.1)
    assert jnp.allclose(loss, ref, rtol=1e-5, atol=1e-5), (loss, ref)

    # Case 2: forced multi-tile grid (exercises the pipelined / accumulator path).
    k_a2, k_p2, k_n2 = jax.random.split(jax.random.PRNGKey(1), 3)
    B2, D2 = 24, 32
    anchor2 = jax.random.normal(k_a2, (B2, D2), dtype=jnp.float32)
    positive2 = jax.random.normal(k_p2, (B2, D2), dtype=jnp.float32)
    negative2 = jax.random.normal(k_n2, (B2, D2), dtype=jnp.float32)

    loss2 = triplet_loss(anchor2, positive2, negative2,
                         margin=0.5, alpha=0.2, block_rows=8)
    jax.block_until_ready(loss2)
    ref2 = triplet_loss_ref(anchor2, positive2, negative2, margin=0.5, alpha=0.2)
    assert jnp.allclose(loss2, ref2, rtol=1e-5, atol=1e-5), (loss2, ref2)

    print("KERNEL_OK")
</pallas_src>

<mosaic_0001>
module attributes {stable_mosaic.version = 11 : i64} {
  func.func @_triplet_loss_kernel(%arg0: i32, %arg1: memref<8x32xf32, #tpu.memory_space<vmem>>, %arg2: memref<8x32xf32, #tpu.memory_space<vmem>>, %arg3: memref<8x32xf32, #tpu.memory_space<vmem>>, %arg4: memref<1x1xf32, #tpu.memory_space<smem>>, %arg5: memref<8x1xf32, #tpu.memory_space<vmem>>, %arg6: memref<8x1xf32, #tpu.memory_space<vmem>>) attributes {dimension_semantics = [#tpu.dimension_semantics<arbitrary>], iteration_bounds = array<i64: 1>, scalar_prefetch = 0 : i64, scratch_operands = 2 : i64, tpu.core_type = #tpu.core_type<tc>, window_params = [{transform_indices = @transform_0, window_bounds = array<i64: 8, 32>}, {transform_indices = @transform_1, window_bounds = array<i64: 8, 32>}, {transform_indices = @transform_2, window_bounds = array<i64: 8, 32>}, {transform_indices = @transform_3, window_bounds = array<i64: 1, 1>}]} {
    %c0 = arith.constant 0 : index
    %c0_0 = arith.constant 0 : index
    %0 = vector.load %arg1[%c0, %c0_0] : memref<8x32xf32, #tpu.memory_space<vmem>>, vector<8x32xf32>
    %c0_1 = arith.constant 0 : index
    %c0_2 = arith.constant 0 : index
    %1 = vector.load %arg2[%c0_1, %c0_2] : memref<8x32xf32, #tpu.memory_space<vmem>>, vector<8x32xf32>
    %c0_3 = arith.constant 0 : index
    %c0_4 = arith.constant 0 : index
    %2 = vector.load %arg3[%c0_3, %c0_4] : memref<8x32xf32, #tpu.memory_space<vmem>>, vector<8x32xf32>
    %3 = arith.subf %2, %0 : vector<8x32xf32>
    %4 = arith.subf %1, %0 : vector<8x32xf32>
    %5 = arith.mulf %3, %3 : vector<8x32xf32>
    %cst = arith.constant dense<0.000000e+00> : vector<8xf32>
    %6 = vector.multi_reduction <add>, %5, %cst [1] : vector<8x32xf32> to vector<8xf32>
    %7 = vector.shape_cast %6 : vector<8xf32> to vector<8x1xf32>
    %8 = arith.mulf %4, %4 : vector<8x32xf32>
    %cst_5 = arith.constant dense<0.000000e+00> : vector<8xf32>
    %9 = vector.multi_reduction <add>, %8, %cst_5 [1] : vector<8x32xf32> to vector<8xf32>
    %10 = vector.shape_cast %9 : vector<8xf32> to vector<8x1xf32>
    %11 = arith.mulf %3, %4 : vector<8x32xf32>
    %cst_6 = arith.constant dense<0.000000e+00> : vector<8xf32>
    %12 = vector.multi_reduction <add>, %11, %cst_6 [1] : vector<8x32xf32> to vector<8xf32>
    %13 = vector.shape_cast %12 : vector<8xf32> to vector<8x1xf32>
    %14 = arith.mulf %7, %10 : vector<8x1xf32>
    %cst_7 = arith.constant 9.99999997E-7 : f32
    %cst_8 = arith.constant 9.99999997E-7 : f32
    %15 = arith.mulf %cst_7, %cst_8 : f32
    %16 = vector.broadcast %15 : f32 to vector<8x1xf32>
    %17 = arith.maximumf %14, %16 : vector<8x1xf32>
    %18 = math.rsqrt %17 : vector<8x1xf32>
    %19 = arith.mulf %13, %18 : vector<8x1xf32>
    %c8_i32 = arith.constant 8 : i32
    %20 = arith.muli %arg0, %c8_i32 : i32
    %21 = tpu.iota {dimensions = array<i32: 0>} : vector<8x1xi32>
    %22 = vector.broadcast %20 : i32 to vector<8x1xi32>
    %23 = arith.addi %22, %21 : vector<8x1xi32>
    %c8_i32_9 = arith.constant 8 : i32
    %24 = vector.broadcast %c8_i32_9 : i32 to vector<8x1xi32>
    %25 = arith.cmpi slt, %23, %24 : vector<8x1xi32>
    %c8_i32_10 = arith.constant 8 : i32
    %26 = arith.muli %arg0, %c8_i32_10 : i32
    %27 = tpu.assume_multiple %26, 8 : i32
    %28 = arith.subf %10, %7 : vector<8x1xf32>
    %cst_11 = arith.constant 0.000000e+00 : f32
    %29 = vector.broadcast %cst_11 : f32 to vector<8x1xf32>
    %30 = arith.select %25, %28, %29 : vector<8x1xi1>, vector<8x1xf32>
    %31 = arith.index_cast %27 : i32 to index
    %c0_12 = arith.constant 0 : index
    %32 = vector.load %arg5[%31, %c0_12] : memref<8x1xf32, #tpu.memory_space<vmem>>, vector<8x1xf32>
    tpu.vector_store %arg5[%31, %c0_12], %30 {strides = array<i32>} : memref<8x1xf32, #tpu.memory_space<vmem>>, vector<8x1xf32>,
    %cst_13 = arith.constant 0.000000e+00 : f32
    %33 = vector.broadcast %cst_13 : f32 to vector<8x1xf32>
    %34 = arith.select %25, %19, %33 : vector<8x1xi1>, vector<8x1xf32>
    %35 = arith.index_cast %27 : i32 to index
    %c0_14 = arith.constant 0 : index
    %36 = vector.load %arg6[%35, %c0_14] : memref<8x1xf32, #tpu.memory_space<vmem>>, vector<8x1xf32>
    tpu.vector_store %arg6[%35, %c0_14], %34 {strides = array<i32>} : memref<8x1xf32, #tpu.memory_space<vmem>>, vector<8x1xf32>,
    %c0_i32 = arith.constant 0 : i32
    %37 = arith.cmpi eq, %arg0, %c0_i32 : i32
    %38 = arith.extui %37 : i1 to i32
    %c0_i32_15 = arith.constant 0 : i32
    %39 = arith.cmpi ne, %38, %c0_i32_15 : i32
    scf.if %39 {
      %c0_16 = arith.constant 0 : index
      %c0_17 = arith.constant 0 : index
      %40 = vector.load %arg6[%c0_16, %c0_17] : memref<8x1xf32, #tpu.memory_space<vmem>>, vector<8x1xf32>
      %41 = vector.shape_cast %40 : vector<8x1xf32> to vector<1x8x1xf32>
      %cst_18 = arith.constant dense<0.000000e+00> : vector<1xf32>
      %42 = vector.multi_reduction <add>, %41, %cst_18 [1, 2] : vector<1x8x1xf32> to vector<1xf32>
      %43 = vector.shape_cast %42 : vector<1xf32> to vector<1x1x1xf32>
      %44 = vector.extract %43[0, 0, 0] : f32 from vector<1x1x1xf32>
      %c0_19 = arith.constant 0 : index
      %c0_20 = arith.constant 0 : index
      %45 = vector.load %arg5[%c0_19, %c0_20] : memref<8x1xf32, #tpu.memory_space<vmem>>, vector<8x1xf32>
      %cst_21 = arith.constant 1.000000e+00 : f32
      %46 = vector.broadcast %cst_21 : f32 to vector<8x1xf32>
      %47 = arith.addf %45, %46 : vector<8x1xf32>
      %cst_22 = arith.constant 1.000000e-01 : f32
      %48 = arith.mulf %cst_22, %44 : f32
      %49 = vector.broadcast %48 : f32 to vector<8x1xf32>
      %50 = arith.subf %47, %49 : vector<8x1xf32>
      %cst_23 = arith.constant 0.000000e+00 : f32
      %51 = vector.broadcast %cst_23 : f32 to vector<8x1xf32>
      %52 = arith.maximumf %50, %51 : vector<8x1xf32>
      %53 = tpu.iota {dimensions = array<i32: 0>} : vector<8x1xi32>
      %c8_i32_24 = arith.constant 8 : i32
      %54 = vector.broadcast %c8_i32_24 : i32 to vector<8x1xi32>
      %55 = arith.cmpi slt, %53, %54 : vector<8x1xi32>
      %cst_25 = arith.constant 0.000000e+00 : f32
      %56 = vector.broadcast %cst_25 : f32 to vector<8x1xf32>
      %57 = arith.select %55, %52, %56 : vector<8x1xi1>, vector<8x1xf32>
      %58 = vector.shape_cast %57 : vector<8x1xf32> to vector<1x8x1xf32>
      %cst_26 = arith.constant dense<0.000000e+00> : vector<1xf32>
      %59 = vector.multi_reduction <add>, %58, %cst_26 [1, 2] : vector<1x8x1xf32> to vector<1xf32>
      %60 = vector.shape_cast %59 : vector<1xf32> to vector<1x1x1xf32>
      %61 = vector.extract %60[0, 0, 0] : f32 from vector<1x1x1xf32>
      %cst_27 = arith.constant 8.000000e+00 : f32
      %62 = arith.divf %61, %cst_27 : f32
      %c0_28 = arith.constant 0 : index
      %c0_29 = arith.constant 0 : index
      %63 = memref.load %arg4[%c0_28, %c0_29] : memref<1x1xf32, #tpu.memory_space<smem>>
      memref.store %62, %arg4[%c0_28, %c0_29] : memref<1x1xf32, #tpu.memory_space<smem>>
    } else {
    }
    return
  }
  func.func @transform_0(%arg0: i32) -> (i32, i32) {
    %c0_i32 = arith.constant 0 : i32
    %c0_i32_0 = arith.constant 0 : i32
    return %arg0, %c0_i32 : i32, i32
  }
  func.func @transform_1(%arg0: i32) -> (i32, i32) {
    %c0_i32 = arith.constant 0 : i32
    %c0_i32_0 = arith.constant 0 : i32
    return %arg0, %c0_i32 : i32, i32
  }
  func.func @transform_2(%arg0: i32) -> (i32, i32) {
    %c0_i32 = arith.constant 0 : i32
    %c0_i32_0 = arith.constant 0 : i32
    return %arg0, %c0_i32 : i32, i32
  }
  func.func @transform_3(%arg0: i32) -> (i32, i32) {
    %c0_i32 = arith.constant 0 : i32
    %c0_i32_0 = arith.constant 0 : i32
    %c0_i32_1 = arith.constant 0 : i32
    return %c0_i32, %c0_i32_0 : i32, i32
  }
}

</mosaic_0001>

<llo_original>
// kernel: tpu_custom_call.1
$region0: #{tpu_custom_call.1}
  #allocation0 [shape = 'u32[]', space=smem, size = 0x4, offset = 0x4, fixed_abs, tag = 'smem constant byte address 0x4 - core index']
  #allocation1 [shape = 'u32[72,128]{1,0:T(1,128)}', space=vmem, size = 0x9000, scoped, tag = 'internal scratch']
  #allocation2 [shape = 'f32[8,1]{1,0:T(8,128)}', space=vmem, size = 0x1000, scoped, tag = 'scratch operand']
  #allocation3 [shape = 'f32[8,1]{1,0:T(8,128)}', space=vmem, size = 0x1000, scoped, tag = 'scratch operand']
  %s0 = inlined_call_operand.hbm [shape: f32[8,32], index: 0, kind: input, shape index: {}]
  %s1 = inlined_call_operand.hbm [shape: f32[8,32], index: 1, kind: input, shape index: {}]
  %s2 = inlined_call_operand.hbm [shape: f32[8,32], index: 2, kind: input, shape index: {}]
  %s3 = inlined_call_operand.hbm [shape: f32[1,1], index: 3, kind: output, shape index: {}]
  %s4 = sld [smem:[#allocation0]]
  $region38: #{tpu_custom_call.1} parent=0
    _
  %s6 = ssub.s32 1, %s4
  %s7 = scalar_select 0, %s6, %s4
  $region1: #{tpu_custom_call.1} parent=0
    #allocation4 [shape = 'u8[4096]{0}', space=vmem, size = 0x1000, scoped, tag = 'input window, operand 0, single buffered']
    #allocation5 [shape = 's32[1]{0}', space=sflag, size = 0x4, scoped, tag = 'scoped memory for tpu_custom_call.1']
    #allocation6 [shape = 's32[1]{0}', space=sflag, size = 0x4, scoped, tag = 'scoped memory for tpu_custom_call.1']
    #allocation7 [shape = 'u8[4096]{0}', space=vmem, size = 0x1000, scoped, tag = 'input window, operand 1, single buffered']
    #allocation8 [shape = 's32[1]{0}', space=sflag, size = 0x4, scoped, tag = 'scoped memory for tpu_custom_call.1']
    #allocation9 [shape = 'u8[4096]{0}', space=vmem, size = 0x1000, scoped, tag = 'input window, operand 2, single buffered']
    #allocation10 [shape = 'u8[512]{0}', space=smem, size = 0x200, scoped, tag = 'output window, operand 0, single buffered']
    %8 = vsyncpa [#allocation5], 0
    %9 = vsyncpa [#allocation8], 0
    %10 = vsyncpa [#allocation6], 0
    // Predicated region
    $region2: #{tpu_custom_call.1} parent=1 // pred_check
      _
    $region3: #{tpu_custom_call.1} parent=1 // pred_check_branch
      %12 = sbr.rel (0) target = $region5
    $region4: #{tpu_custom_call.1} parent=1 // pred_region
      %14 = vsyncadd [#allocation5], 0
      %s16 = sshll.u32 %s0, 4
      %s17 = int_to_ptr.hbm [resolvable:$true] %s16
      %s18 = sshll.u32 [#allocation4], 4
      %s19 = int_to_ptr.vmem [resolvable:$true] %s18
      %21 = dma.hbm_to_vmem [thread:$0]  %s17, 128, %s19, [#allocation5]
    $region5: #{tpu_custom_call.1} parent=1 // pred_fallthru
      _
    // Predicated region
    $region6: #{tpu_custom_call.1} parent=1 // pred_check
      _
    $region7: #{tpu_custom_call.1} parent=1 // pred_check_branch
      %23 = sbr.rel (0) target = $region9
    $region8: #{tpu_custom_call.1} parent=1 // pred_region
      %25 = vsyncadd [#allocation8], 0
      %s27 = sshll.u32 %s1, 4
      %s28 = int_to_ptr.hbm [resolvable:$true] %s27
      %s29 = sshll.u32 [#allocation7], 4
      %s30 = int_to_ptr.vmem [resolvable:$true] %s29
      %32 = dma.hbm_to_vmem [thread:$0]  %s28, 128, %s30, [#allocation8]
    $region9: #{tpu_custom_call.1} parent=1 // pred_fallthru
      _
    // Predicated region
    $region10: #{tpu_custom_call.1} parent=1 // pred_check
      _
    $region11: #{tpu_custom_call.1} parent=1 // pred_check_branch
      %34 = sbr.rel (0) target = $region13
    $region12: #{tpu_custom_call.1} parent=1 // pred_region
      %36 = vsyncadd [#allocation8], 0
      %s38 = sshll.u32 %s2, 4
      %s39 = int_to_ptr.hbm [resolvable:$true] %s38
      %s40 = sshll.u32 [#allocation9], 4
      %s41 = int_to_ptr.vmem [resolvable:$true] %s40
      %43 = dma.hbm_to_vmem [thread:$0]  %s39, 128, %s41, [#allocation8]
    $region13: #{tpu_custom_call.1} parent=1 // pred_fallthru
      _
    // Predicated region
    $region14: #{tpu_custom_call.1} parent=1 // pred_check
      _
    $region15: #{tpu_custom_call.1} parent=1 // pred_check_branch
      %45 = sbr.rel (0) target = $region17
    $region16: #{tpu_custom_call.1} parent=1 // pred_region
      %47 = dma.done [#allocation5], 128
    $region17: #{tpu_custom_call.1} parent=1 // pred_fallthru
      _
    // Predicated region
    $region18: #{tpu_custom_call.1} parent=1 // pred_check
      _
    $region19: #{tpu_custom_call.1} parent=1 // pred_check_branch
      %49 = sbr.rel (0) target = $region21
    $region20: #{tpu_custom_call.1} parent=1 // pred_region
      %51 = dma.done [#allocation8], 128
    $region21: #{tpu_custom_call.1} parent=1 // pred_fallthru
      _
    // Predicated region
    $region22: #{tpu_custom_call.1} parent=1 // pred_check
      _
    $region23: #{tpu_custom_call.1} parent=1 // pred_check_branch
      %53 = sbr.rel (0) target = $region25
    $region24: #{tpu_custom_call.1} parent=1 // pred_region
      %55 = dma.done [#allocation8], 128
    $region25: #{tpu_custom_call.1} parent=1 // pred_fallthru
      _
    %v56 = vld [vmem:[#allocation4] sm:$0xff]
    %v57 = vld [vmem:[#allocation7] sm:$0xff]
    %v58 = vld [vmem:[#allocation9] sm:$0xff]
    %v59 = vsub.f32 %v58, %v56
    %v60 = vsub.f32 %v57, %v56
    %v61 = vmul.f32 %v59, %v59
    %vm62 = vcmask 261120
    %v63 = vsel %vm62, %v61, 0.0
    %64 = vadd.xlane.f32.xlu0 %v63
    %v65 = vpop.xlane.xlu0 %64
    %v66 = vmul.f32 %v60, %v60
    %v67 = vsel %vm62, %v66, 0.0
    %68 = vadd.xlane.f32.xlu0 %v67
    %v69 = vpop.xlane.xlu0 %68
    %v70 = vmul.f32 %v59, %v60
    %v71 = vsel %vm62, %v70, 0.0
    %72 = vadd.xlane.f32.xlu0 %v71
    %v73 = vpop.xlane.xlu0 %72
    %v74 = vmul.f32 %v65, %v69
    %v75 = vmax.f32 %v74, 1e-12
    %v76 = vrsqrt.pop %v75
    %v77 = vmul.f32 %v76, %v75
    %v78 = vmul.f32 %v77, %v76
    %v79 = vmul.f32 0.5, %v78
    %v80 = vsub.f32 1.5, %v79
    %v81 = vmul.f32 %v76, %v80
    %vm82 = vweird.f32 %v75
    %vm83 = vweird.f32 %v76
    %vm84 = vmor %vm82, %vm83
    %v85 = vsel %vm84, %v76, %v81
    %v86 = vmul.f32 %v73, %v85
    %s87 = smul.u32 0, 8
    %v88 = vlaneseq
    %v89 = vshrl.u32 %v88, 7
    %v90 = vstv %s87
    %v91 = vadd.s32 %v90, %v89
    %vm92 = vcmp.lt.s32.totalorder %v91, 8
    %v93 = vsub.f32 %v69, %v65
    %v94 = vsel %vm92, %v93, 0.0
    %s95 = scalar_lea.vmem [#allocation2], %s87
    %vm96 = vcmask 7168
    %97 = vst.msk [vmem:[%s95] sm:$0xff] %vm96, %v94
    %v98 = vsel %vm92, %v86, 0.0
    %s99 = scalar_lea.vmem [#allocation3], %s87
    %100 = vst.msk [vmem:[%s99] sm:$0xff] %vm96, %v98
    %p101 = scmp.eq.s32.totalorder 0, 0
    // Predicated region
    $region26: #{tpu_custom_call.1} parent=1 // pred_check
      %p102 = pneg %p101
    $region27: #{tpu_custom_call.1} parent=1 // pred_check_branch
      %104 = sbr.rel (%p102) target = $region29
    $region28: #{tpu_custom_call.1} parent=1 // pred_region
      %v105 = vld [vmem:[#allocation3] sm:$0xff]
      %v106 = vsel %vm96, %v105, 0.0
      %107 = vadd.xlane.f32.xlu0 %v106
      %v108 = vpop.xlane.xlu0 %107
      %v109 = vrot.slane %v108, 4
      %v110 = vadd.f32 %v108, %v109
      %v111 = vrot.slane %v110, 2
      %v112 = vadd.f32 %v110, %v111
      %v113 = vrot.slane %v112, 1
      %v114 = vadd.f32 %v112, %v113
      %s115 = vtos %v114
      %v116 = vld [vmem:[#allocation2] sm:$0xff]
      %v117 = vadd.f32 %v116, 1.0
      %s118 = smul.f32 %s115, 0.1
      %v119 = vstv %s118
      %v120 = vsub.f32 %v117, %v119
      %v121 = vmax.f32 %v120, 0.0
      %vm122 = vcmp.lt.s32.totalorder %v89, 8
      %v123 = vsel %vm122, %v121, 0.0
      %v124 = vsel %vm96, %v123, 0.0
      %125 = vadd.xlane.f32.xlu0 %v124
      %v126 = vpop.xlane.xlu0 %125
      %v127 = vrot.slane %v126, 4
      %v128 = vadd.f32 %v126, %v127
      %v129 = vrot.slane %v128, 2
      %v130 = vadd.f32 %v128, %v129
      %v131 = vrot.slane %v130, 1
      %v132 = vadd.f32 %v130, %v131
      %s133 = vtos %v132
      %v134 = vrcp.pop 8.0
      %v135 = vmul.f32 8.0, %v134
      %v136 = vsub.f32 1.0, %v135
      %v137 = vmul.f32 %v134, %v136
      %v138 = vadd.f32 %v134, %v137
      %vm139 = vweird.f32 %v134
      %v140 = vsel %vm139, %v134, %v138
      %s141 = vtos %v140
      %s142 = smul.f32 %s133, %s141
      %s143 = scalar_lea.smem [#allocation10], 0
      %144 = sst [smem:[%s143]] %s142
    $region29: #{tpu_custom_call.1} parent=1 // pred_fallthru
      _
    // Predicated region
    $region30: #{tpu_custom_call.1} parent=1 // pred_check
      _
    $region31: #{tpu_custom_call.1} parent=1 // pred_check_branch
      %146 = sbr.rel (0) target = $region33
    $region32: #{tpu_custom_call.1} parent=1 // pred_region
      %148 = vsyncadd [#allocation6], 0
      %s150 = sshll.u32 %s3, 4
      %s151 = int_to_ptr.hbm [resolvable:$true] %s150
      %153 = dma.smem_to_hbm [#allocation10], 16, %s151, [#allocation6]
    $region33: #{tpu_custom_call.1} parent=1 // pred_fallthru
      _
    // Predicated region
    $region34: #{tpu_custom_call.1} parent=1 // pred_check
      _
    $region35: #{tpu_custom_call.1} parent=1 // pred_check_branch
      %155 = sbr.rel (0) target = $region37
    $region36: #{tpu_custom_call.1} parent=1 // pred_region
      %157 = dma.done [#allocation6], 16
    $region37: #{tpu_custom_call.1} parent=1 // pred_fallthru
      _
    %158 = sfence
    %159 = vsyncpa [#allocation5], 1
    %160 = vsyncpa [#allocation8], 1
    %161 = vsyncpa [#allocation6], 1

</llo_original>
